<compile_context>
chip_gen: v5e
topology: v5e:2x2
jax: 0.10.0
libtpu: 0.0.40
codegen_flags: <defaults>
</compile_context>

<pallas_src>
import functools
import math

import jax
import jax.numpy as jnp
from jax.experimental import pallas as pl
from jax.experimental.pallas import tpu as pltpu


# ---------------------------------------------------------------------------
# Kernels: pure streaming broadcast-add, pe streamed from HBM.
# ---------------------------------------------------------------------------
def _pe_add_kernel(x_ref, pe_ref, o_ref):
    # x_ref / o_ref: (ts, B, D); pe_ref: (ts, 1, D).  jnp promotion gives an f32
    # add when pe is the f32 buffer (exact torch semantics) and a native bf16
    # add when the module supplies its pre-cast bf16 table.
    o_ref[...] = (x_ref[...] + pe_ref[...]).astype(o_ref.dtype)


def _pe_add_flat_kernel(x_ref, pe_ref, o_ref, *, batch):
    # Lane-dense path: x_ref / o_ref: (ts, B*D); pe_ref: (ts, D), D % 128 == 0.
    # jnp.tile along the lane axis is whole-vreg copies (D is a lane multiple).
    pe = jnp.tile(pe_ref[...], (1, batch))
    o_ref[...] = (x_ref[...] + pe).astype(o_ref.dtype)


# ---------------------------------------------------------------------------
# Tiling helpers (padded-VMEM accounting, small capped blocks, >= 4 even steps)
# ---------------------------------------------------------------------------
_TARGET_BLOCK_BYTES = 4 << 20   # padded (x-in + out + pe) bytes per grid step
_MIN_STEPS = 4                  # >= 2 steps per TensorCore on v7x megacore


def _round_up(n, m):
    return ((n + m - 1) // m) * m


def _choose_seq_tile(S, padded_bytes_per_row):
    """Rows per grid step from a ~4 MiB padded working-set target per step."""
    rows = max(8, _TARGET_BLOCK_BYTES // max(padded_bytes_per_row, 1))
    steps = pl.cdiv(S, rows)
    if steps > 1:
        steps = max(steps, _MIN_STEPS)      # enough steps to hide prologue/epilogue DMA
        steps += steps % 2                  # even step count balances v7x's two cores
        steps = min(steps, pl.cdiv(S, 8))   # but never below 8 rows per step
    tile = pl.cdiv(S, steps)
    if tile < S:
        tile = _round_up(tile, 8)           # sublane-aligned block rows
    return min(tile, S)


# ---------------------------------------------------------------------------
# Wrapper
# ---------------------------------------------------------------------------
def positional_encoding_add(x, pe_table, *, donate_x=False):
    """out = x + pe_table[:seq_len] (broadcast over batch).

    x: (S, B, D); pe_table: (max_len, 1, D) -- the f32 buffer or a pre-cast copy
    matching x.dtype.  Set donate_x=True only when the caller really donates x;
    otherwise XLA would insert a defensive full copy before the kernel.
    """
    S, B, D = x.shape
    max_len = pe_table.shape[0]
    assert pe_table.shape == (max_len, 1, D), "pe table must be (max_len, 1, d_model)"
    assert S <= max_len, "sequence length exceeds max_len of the pe table"

    x_isz = jnp.dtype(x.dtype).itemsize
    pe_isz = jnp.dtype(pe_table.dtype).itemsize
    aliases = {0: 0} if donate_x else {}
    cost = pl.CostEstimate(
        flops=S * B * D,
        transcendentals=0,
        bytes_accessed=2 * S * B * D * x_isz + S * D * pe_isz,
    )
    cparams = pltpu.CompilerParams(
        dimension_semantics=("parallel",),
        vmem_limit_bytes=32 << 20,   # blocks are capped small; default-sized scratch is plenty
    )

    # Lane-dense fast path: fold (B, D) -> B*D when B is sublane-sparse but D is
    # a multiple of 128.  The reshape of row-major data is free (no copy); it
    # removes the 8/B sublane padding on x/out blocks and keeps stores unmasked.
    use_flat = (D % 128 == 0) and (B % 8 != 0)

    if use_flat:
        x_in = x.reshape(S, B * D)
        pe_in = pe_table.reshape(max_len, D)
        x_row = (B * D) * x_isz                 # already lane-dense
        pe_row = D * pe_isz
        ts = _choose_seq_tile(S, 2 * x_row + pe_row)
        if ts % 8 != 0:
            # Single ragged block: make the pe block's sublane dim equal the full
            # array dim so the (8, 128) BlockSpec rule is satisfied.
            pe_in = pe_in[:S]
        grid = (pl.cdiv(S, ts),)
        out = pl.pallas_call(
            functools.partial(_pe_add_flat_kernel, batch=B),
            out_shape=jax.ShapeDtypeStruct((S, B * D), x.dtype),
            grid_spec=pltpu.PrefetchScalarGridSpec(
                num_scalar_prefetch=0,
                grid=grid,
                in_specs=[pl.BlockSpec((ts, B * D), lambda i: (i, 0)),
                          pl.BlockSpec((ts, D), lambda i: (i, 0))],
                out_specs=pl.BlockSpec((ts, B * D), lambda i: (i, 0)),
            ),
            input_output_aliases=aliases,
            compiler_params=cparams,
            cost_estimate=cost,
        )(x_in, pe_in)
        return out.reshape(S, B, D)

    # Generic path (any B / D).  Padded-VMEM accounting: the pe block's singleton
    # batch dim pads to 8 sublanes; B pads to 8 and D to 128 for x/out blocks.
    x_row = _round_up(B, 8) * _round_up(D, 128) * x_isz
    pe_row = 8 * _round_up(D, 128) * pe_isz
    ts = _choose_seq_tile(S, 2 * x_row + pe_row)
    grid = (pl.cdiv(S, ts),)
    x_spec = pl.BlockSpec((ts, B, D), lambda i: (i, 0, 0))
    pe_spec = pl.BlockSpec((ts, 1, D), lambda i: (i, 0, 0))
    # TODO(synk): sweep pipeline_mode=pl.Buffered(3) on x_spec for v7x (smooths
    # DMA jitter at 3.2 TB/s now that per-step blocks are only a few MiB).
    return pl.pallas_call(
        _pe_add_kernel,
        out_shape=jax.ShapeDtypeStruct((S, B, D), x.dtype),
        grid_spec=pltpu.PrefetchScalarGridSpec(
            num_scalar_prefetch=0,
            grid=grid,
            in_specs=[x_spec, pe_spec],
            out_specs=x_spec,
        ),
        input_output_aliases=aliases,
        compiler_params=cparams,
        cost_estimate=cost,
    )(x, pe_table)


class PositionalEncoding:
    """JAX/Pallas equivalent of the PyTorch PositionalEncoding module."""

    def __init__(self, d_model, max_len=5000):
        assert d_model % 2 == 0, "d_model must be even (as the torch module assumes)"
        position = jnp.arange(max_len, dtype=jnp.float32)[:, None]            # (L, 1)
        div_term = jnp.exp(jnp.arange(0, d_model, 2, dtype=jnp.float32)
                           * (-math.log(10000.0) / d_model))                  # (D/2,)
        ang = position * div_term                                             # (L, D/2)
        pe = jnp.zeros((max_len, d_model), jnp.float32)
        pe = pe.at[:, 0::2].set(jnp.sin(ang))
        pe = pe.at[:, 1::2].set(jnp.cos(ang))
        # (max_len, 1, d_model) float32 -- same shape/dtype as the torch buffer.
        self.pe = pe[:, None, :]
        self._pe_by_dtype = {jnp.dtype(jnp.float32): self.pe}

    def __call__(self, x, *, donate_x=False):
        dt = jnp.dtype(x.dtype)
        if dt in (jnp.dtype(jnp.bfloat16), jnp.dtype(jnp.float16)):
            # One-time low-precision copy of the buffer: halves pe HBM/VMEM
            # traffic and avoids per-vreg converts.  Result can differ from the
            # f32-buffer add by <= 1 ulp of the (already low-precision) output.
            pe = self._pe_by_dtype.setdefault(dt, self.pe.astype(dt))
        else:
            pe = self.pe
        return positional_encoding_add(x, pe, donate_x=donate_x)


# ---------------------------------------------------------------------------
# Pure-JAX reference (replicates the PyTorch forward) + demo
# ---------------------------------------------------------------------------
def _reference(x):
    S, B, D = x.shape
    position = jnp.arange(S, dtype=jnp.float32)[:, None]
    div_term = jnp.exp(jnp.arange(0, D, 2, dtype=jnp.float32)
                       * (-math.log(10000.0) / D))
    pe = jnp.zeros((S, D), jnp.float32)
    pe = pe.at[:, 0::2].set(jnp.sin(position * div_term))
    pe = pe.at[:, 1::2].set(jnp.cos(position * div_term))
    return (x.astype(jnp.float32) + pe[:, None, :]).astype(x.dtype)


if __name__ == "__main__":
    key = jax.random.PRNGKey(0)
    k1, k2 = jax.random.split(key)

    # Case 1: generic-layout path (D % 128 != 0, B < 8): seq=8, batch=2, d_model=32.
    S, B, D = 8, 2, 32
    x = jax.random.normal(k1, (S, B, D), dtype=jnp.float32)
    module = PositionalEncoding(d_model=D, max_len=5000)
    out = jax.block_until_ready(module(x))
    assert out.shape == (S, B, D) and out.dtype == x.dtype
    assert jnp.allclose(out, _reference(x), atol=1e-5, rtol=1e-5), "mismatch (generic path)"

    # Case 2: lane-dense flattened path (D % 128 == 0, B < 8).
    S2, B2, D2 = 16, 2, 128
    x2 = jax.random.normal(k2, (S2, B2, D2), dtype=jnp.float32)
    module2 = PositionalEncoding(d_model=D2, max_len=512)
    out2 = jax.block_until_ready(module2(x2))
    assert out2.shape == (S2, B2, D2) and out2.dtype == x2.dtype
    assert jnp.allclose(out2, _reference(x2), atol=1e-5, rtol=1e-5), "mismatch (flat path)"

    print("KERNEL_OK")
</pallas_src>

<mosaic_0001>
module attributes {stable_mosaic.version = 11 : i64} {
  func.func @_pe_add_kernel(%arg0: i32, %arg1: memref<8x2x32xf32, #tpu.memory_space<vmem>>, %arg2: memref<8x1x32xf32, #tpu.memory_space<vmem>>, %arg3: memref<8x2x32xf32, #tpu.memory_space<vmem>>) attributes {dimension_semantics = [#tpu.dimension_semantics<parallel>], iteration_bounds = array<i64: 1>, scalar_prefetch = 0 : i64, scratch_operands = 0 : i64, tpu.core_type = #tpu.core_type<tc>, window_params = [{transform_indices = @transform_0, window_bounds = array<i64: 8, 2, 32>}, {transform_indices = @transform_1, window_bounds = array<i64: 8, 1, 32>}, {transform_indices = @transform_2, window_bounds = array<i64: 8, 2, 32>}]} {
    %c0 = arith.constant 0 : index
    %c0_0 = arith.constant 0 : index
    %c0_1 = arith.constant 0 : index
    %0 = vector.load %arg1[%c0, %c0_0, %c0_1] : memref<8x2x32xf32, #tpu.memory_space<vmem>>, vector<8x2x32xf32>
    %c0_2 = arith.constant 0 : index
    %c0_3 = arith.constant 0 : index
    %c0_4 = arith.constant 0 : index
    %1 = vector.load %arg2[%c0_2, %c0_3, %c0_4] : memref<8x1x32xf32, #tpu.memory_space<vmem>>, vector<8x1x32xf32>
    %2 = vector.broadcast %1 : vector<8x1x32xf32> to vector<8x2x32xf32>
    %3 = arith.addf %0, %2 : vector<8x2x32xf32>
    %c0_5 = arith.constant 0 : index
    %c0_6 = arith.constant 0 : index
    %c0_7 = arith.constant 0 : index
    %4 = vector.load %arg3[%c0_5, %c0_6, %c0_7] : memref<8x2x32xf32, #tpu.memory_space<vmem>>, vector<8x2x32xf32>
    tpu.vector_store %arg3[%c0_5, %c0_6, %c0_7], %3 {strides = array<i32>} : memref<8x2x32xf32, #tpu.memory_space<vmem>>, vector<8x2x32xf32>,
    return
  }
  func.func @transform_0(%arg0: i32) -> (i32, i32, i32) {
    %c0_i32 = arith.constant 0 : i32
    %c0_i32_0 = arith.constant 0 : i32
    %c0_i32_1 = arith.constant 0 : i32
    return %arg0, %c0_i32, %c0_i32_0 : i32, i32, i32
  }
  func.func @transform_1(%arg0: i32) -> (i32, i32, i32) {
    %c0_i32 = arith.constant 0 : i32
    %c0_i32_0 = arith.constant 0 : i32
    %c0_i32_1 = arith.constant 0 : i32
    return %arg0, %c0_i32, %c0_i32_0 : i32, i32, i32
  }
  func.func @transform_2(%arg0: i32) -> (i32, i32, i32) {
    %c0_i32 = arith.constant 0 : i32
    %c0_i32_0 = arith.constant 0 : i32
    %c0_i32_1 = arith.constant 0 : i32
    return %arg0, %c0_i32, %c0_i32_0 : i32, i32, i32
  }
}

</mosaic_0001>

<llo_original>
// kernel: tpu_custom_call.1
$region0: #{tpu_custom_call.1}
  #allocation0 [shape = 'u32[]', space=smem, size = 0x4, offset = 0x4, fixed_abs, tag = 'smem constant byte address 0x4 - core index']
  #allocation1 [shape = 'u32[72,128]{1,0:T(1,128)}', space=vmem, size = 0x9000, scoped, tag = 'internal scratch']
  %s0 = inlined_call_operand.vmem [shape: f32[8,2,32], index: 0, kind: input, shape index: {}]
  %s1 = inlined_call_operand.vmem [shape: f32[5000,1,32], index: 1, kind: input, shape index: {}]
  %s2 = inlined_call_operand.hbm [shape: f32[8,2,32], index: 2, kind: output, shape index: {}]
  %s3 = sld [smem:[#allocation0]]
  $region18: #{tpu_custom_call.1} parent=0
    _
  %s5 = ssub.s32 1, %s3
  %s6 = scalar_select 0, %s5, %s3
  $region1: #{tpu_custom_call.1} parent=0
    #allocation2 [shape = 'u8[8192]{0}', space=vmem, size = 0x2000, scoped, tag = 'output window, operand 0, single buffered']
    #allocation3 [shape = 's32[1]{0}', space=sflag, size = 0x4, scoped, tag = 'scoped memory for tpu_custom_call.1']
    %7 = vsyncpa [#allocation3], 0
    // Predicated region
    $region2: #{tpu_custom_call.1} parent=1 // pred_check
      _
    $region3: #{tpu_custom_call.1} parent=1 // pred_check_branch
      %9 = sbr.rel (0) target = $region5
    $region4: #{tpu_custom_call.1} parent=1 // pred_region
      _
    $region5: #{tpu_custom_call.1} parent=1 // pred_fallthru
      _
    // Predicated region
    $region6: #{tpu_custom_call.1} parent=1 // pred_check
      _
    $region7: #{tpu_custom_call.1} parent=1 // pred_check_branch
      %11 = sbr.rel (0) target = $region9
    $region8: #{tpu_custom_call.1} parent=1 // pred_region
      _
    $region9: #{tpu_custom_call.1} parent=1 // pred_fallthru
      _
    %v12 = vld [vmem:[%s0] sm:$0x3]
    %v13 = vld [vmem:[%s0 + $0x2] sm:$0x3]
    %v14 = vld [vmem:[%s0 + $0x4] sm:$0x3]
    %v15 = vld [vmem:[%s0 + $0x6] sm:$0x3]
    %v16 = vld [vmem:[%s0 + $0x8] sm:$0x3]
    %v17 = vld [vmem:[%s0 + $0xa] sm:$0x3]
    %v18 = vld [vmem:[%s0 + $0xc] sm:$0x3]
    %v19 = vld [vmem:[%s0 + $0xe] sm:$0x3]
    %v20 = vld [vmem:[%s1] sm:$0x1]
    %v21 = vld [vmem:[%s1 + $0x1] sm:$0x1]
    %v22 = vld [vmem:[%s1 + $0x2] sm:$0x1]
    %v23 = vld [vmem:[%s1 + $0x3] sm:$0x1]
    %v24 = vld [vmem:[%s1 + $0x4] sm:$0x1]
    %v25 = vld [vmem:[%s1 + $0x5] sm:$0x1]
    %v26 = vld [vmem:[%s1 + $0x6] sm:$0x1]
    %v27 = vld [vmem:[%s1 + $0x7] sm:$0x1]
    %v36 = vperm.slane %v20, 0
    %v37 = vperm.slane %v21, 0
    %v38 = vperm.slane %v22, 0
    %v39 = vperm.slane %v23, 0
    %v40 = vperm.slane %v24, 0
    %v41 = vperm.slane %v25, 0
    %v42 = vperm.slane %v26, 0
    %v43 = vperm.slane %v27, 0
    %v52 = vadd.f32 %v12, %v36
    %v53 = vadd.f32 %v13, %v37
    %v54 = vadd.f32 %v14, %v38
    %v55 = vadd.f32 %v15, %v39
    %v56 = vadd.f32 %v16, %v40
    %v57 = vadd.f32 %v17, %v41
    %v58 = vadd.f32 %v18, %v42
    %v59 = vadd.f32 %v19, %v43
    %vm60 = vcmask 254976
    %61 = vst.msk [vmem:[#allocation2] sm:$0x3] %vm60, %v52
    %62 = vst.msk [vmem:[#allocation2 + $0x2] sm:$0x3] %vm60, %v53
    %63 = vst.msk [vmem:[#allocation2 + $0x4] sm:$0x3] %vm60, %v54
    %64 = vst.msk [vmem:[#allocation2 + $0x6] sm:$0x3] %vm60, %v55
    %65 = vst.msk [vmem:[#allocation2 + $0x8] sm:$0x3] %vm60, %v56
    %66 = vst.msk [vmem:[#allocation2 + $0xa] sm:$0x3] %vm60, %v57
    %67 = vst.msk [vmem:[#allocation2 + $0xc] sm:$0x3] %vm60, %v58
    %68 = vst.msk [vmem:[#allocation2 + $0xe] sm:$0x3] %vm60, %v59
    // Predicated region
    $region10: #{tpu_custom_call.1} parent=1 // pred_check
      _
    $region11: #{tpu_custom_call.1} parent=1 // pred_check_branch
      %70 = sbr.rel (0) target = $region13
    $region12: #{tpu_custom_call.1} parent=1 // pred_region
      %72 = vsyncadd [#allocation3], 0
      %s73 = sshll.u32 [#allocation2], 4
      %s74 = int_to_ptr.vmem [resolvable:$true] %s73
      %s75 = sshll.u32 %s2, 4
      %s76 = int_to_ptr.hbm [resolvable:$true] %s75
      %81 = dma.vmem_to_hbm [thread:$0]  %s74, 256, %s76, [#allocation3], 32, 32, 2
    $region13: #{tpu_custom_call.1} parent=1 // pred_fallthru
      _
    // Predicated region
    $region14: #{tpu_custom_call.1} parent=1 // pred_check
      _
    $region15: #{tpu_custom_call.1} parent=1 // pred_check_branch
      %83 = sbr.rel (0) target = $region17
    $region16: #{tpu_custom_call.1} parent=1 // pred_region
      %85 = dma.done [#allocation3], 256
    $region17: #{tpu_custom_call.1} parent=1 // pred_fallthru
      _
    %86 = vsyncpa [#allocation3], 1

</llo_original>
